<compile_context>
chip_gen: v5e
topology: v5e:2x2
jax: 0.10.0
libtpu: 0.0.40
codegen_flags: <defaults>
</compile_context>

<pallas_src>
import itertools
import numpy as np
import jax
import jax.numpy as jnp
from jax.experimental import pallas as pl
from jax.experimental.pallas import tpu as pltpu

COST_CLASS = 1.0
COST_BBOX = 5.0
COST_GIOU = 2.0
EOS_COEF = 0.1

LANE = 128      # vreg lane width
SUBLANE = 8     # vreg sublane count


def _round_up(x, m):
    return (x + m - 1) // m * m


# ---------------------------------------------------------------------------
# Kernel 1: matcher cost matrix
# ---------------------------------------------------------------------------
def _cost_kernel(logits_ref, out_bbox_ref, tgt_onehot_ref, tgt_bbox_t_ref, cost_ref):
    # ---- softmax over classes; denominator via EUP reciprocal (no VALU divide) ----
    logits = logits_ref[...]                                     # (TN, C)
    m = jnp.max(logits, axis=-1, keepdims=True)
    e = jnp.exp(logits - m)
    inv_s = pl.reciprocal(jnp.sum(e, axis=-1, keepdims=True), approx=False)
    prob = e * inv_s                                             # (TN, C)

    # ---- cost_class = -prob[:, tgt_ids] as a one-hot matmul on the MXU.
    # Kept f32: bf16 rounding of prob (~2^-9 rel) is marginal vs the 1e-3 check.
    acc = (-COST_CLASS) * jnp.dot(prob, tgt_onehot_ref[...],
                                  preferred_element_type=jnp.float32)  # (TN, T)

    ob = out_bbox_ref[...]        # (TN, 4)  cxcywh
    tbt = tgt_bbox_t_ref[...]     # (4, T)   cxcywh (transposed)
    o_cx = ob[:, 0:1]; o_cy = ob[:, 1:2]; o_w = ob[:, 2:3]; o_h = ob[:, 3:4]
    t_cx = tbt[0:1, :]; t_cy = tbt[1:2, :]; t_w = tbt[2:3, :]; t_h = tbt[3:4, :]

    # ---- cost_bbox: pairwise L1, accumulated term by term (fewer live slabs) ----
    acc += COST_BBOX * jnp.abs(o_cx - t_cx)
    acc += COST_BBOX * jnp.abs(o_cy - t_cy)
    acc += COST_BBOX * jnp.abs(o_w - t_w)
    acc += COST_BBOX * jnp.abs(o_h - t_h)

    # ---- cxcywh -> xyxy ----
    o_x0 = o_cx - 0.5 * o_w; o_y0 = o_cy - 0.5 * o_h
    o_x1 = o_cx + 0.5 * o_w; o_y1 = o_cy + 0.5 * o_h
    t_x0 = t_cx - 0.5 * t_w; t_y0 = t_cy - 0.5 * t_h
    t_x1 = t_cx + 0.5 * t_w; t_y1 = t_cy + 0.5 * t_h

    area1 = o_w * o_h             # (TN, 1)
    area2 = t_w * t_h             # (1, T)

    inter = (jnp.maximum(jnp.minimum(o_x1, t_x1) - jnp.maximum(o_x0, t_x0), 0.0)
             * jnp.maximum(jnp.minimum(o_y1, t_y1) - jnp.maximum(o_y0, t_y0), 0.0))
    union = area1 + area2 - inter
    enc = (jnp.maximum(jnp.maximum(o_x1, t_x1) - jnp.minimum(o_x0, t_x0), 0.0)
           * jnp.maximum(jnp.maximum(o_y1, t_y1) - jnp.minimum(o_y0, t_y0), 0.0))

    # giou = inter/union - (enc - union)/enc; divides -> EUP reciprocals
    inv_union = pl.reciprocal(union, approx=False)
    inv_enc = pl.reciprocal(enc, approx=False)
    giou = inter * inv_union - 1.0 + union * inv_enc
    acc += COST_GIOU * (-giou)

    cost_ref[...] = acc


def compute_cost_matrix(pred_logits, pred_boxes, tgt_ids, tgt_boxes, tile_n=1024):
    """Returns C with shape (bs, num_queries, T), T = total number of targets."""
    bs, nq, nc = pred_logits.shape
    N = bs * nq
    T = int(tgt_ids.shape[0])

    # Lane-dense output: pad target axis (lanes) up to a multiple of 128.
    # Padded columns use a non-degenerate dummy box (area 1) so no NaN/Inf appears.
    T_pad = max(LANE, _round_up(T, LANE))

    # Row tiling: TILE_N sized for VMEM (512-1024 fits v7x's 64 MiB comfortably;
    # also fine on v5e/v6e).  Pad N so the grid divides evenly.
    tile_n = _round_up(min(int(tile_n), _round_up(N, SUBLANE)), SUBLANE)
    N_pad = _round_up(N, tile_n)

    logits = jnp.zeros((N_pad, nc), jnp.float32).at[:N].set(
        pred_logits.reshape(N, nc).astype(jnp.float32))
    out_bbox = jnp.zeros((N_pad, 4), jnp.float32).at[:N].set(
        pred_boxes.reshape(N, 4).astype(jnp.float32))

    onehot = jax.nn.one_hot(tgt_ids, nc, dtype=jnp.float32).T        # (nc, T)
    tgt_onehot = jnp.zeros((nc, T_pad), jnp.float32).at[:, :T].set(onehot)
    dummy = jnp.array([0.5, 0.5, 1.0, 1.0], jnp.float32)             # unit box
    tgt_bbox_t = jnp.tile(dummy[:, None], (1, T_pad)).at[:, :T].set(
        tgt_boxes.astype(jnp.float32).T)

    cost = pl.pallas_call(
        _cost_kernel,
        out_shape=jax.ShapeDtypeStruct((N_pad, T_pad), jnp.float32),
        grid=(N_pad // tile_n,),
        in_specs=[
            pl.BlockSpec((tile_n, nc), lambda i: (i, 0)),
            pl.BlockSpec((tile_n, 4), lambda i: (i, 0)),
            pl.BlockSpec((nc, T_pad), lambda i: (0, 0)),   # replicated
            pl.BlockSpec((4, T_pad), lambda i: (0, 0)),    # replicated
        ],
        out_specs=pl.BlockSpec((tile_n, T_pad), lambda i: (i, 0)),
        compiler_params=pltpu.CompilerParams(
            dimension_semantics=("parallel",),             # megacore on v7x
            vmem_limit_bytes=32 * 1024 * 1024),
    )(logits, out_bbox, tgt_onehot, tgt_bbox_t)

    return cost[:N, :T].reshape(bs, nq, T)


# ---------------------------------------------------------------------------
# Kernel 2: weighted cross-entropy (loss_ce) over all queries
# ---------------------------------------------------------------------------
def _weighted_ce_kernel(logits_ref, onehot_ref, w_ref, wnll_ref):
    x = logits_ref[...]                                      # (TN, C)
    m = jnp.max(x, axis=-1, keepdims=True)
    e = jnp.exp(x - m)
    lse = m + jnp.log(jnp.sum(e, axis=-1, keepdims=True))    # (TN, 1)
    tgt_logit = jnp.sum(x * onehot_ref[...], axis=-1, keepdims=True)
    wnll_ref[...] = w_ref[...] * (lse - tgt_logit)


def weighted_cross_entropy(logits, target_classes, class_weight, tile_n=1024):
    """PyTorch-style weighted CE: sum(w[y]*nll)/sum(w[y])."""
    N, C = logits.shape
    tile_n = _round_up(min(int(tile_n), _round_up(N, SUBLANE)), SUBLANE)
    N_pad = _round_up(N, tile_n)

    x = jnp.zeros((N_pad, C), jnp.float32).at[:N].set(logits.astype(jnp.float32))
    onehot = jnp.zeros((N_pad, C), jnp.float32).at[:N].set(
        jax.nn.one_hot(target_classes, C, dtype=jnp.float32))
    w = jnp.zeros((N_pad, 1), jnp.float32).at[:N, 0].set(
        class_weight[target_classes].astype(jnp.float32))

    wnll = pl.pallas_call(
        _weighted_ce_kernel,
        out_shape=jax.ShapeDtypeStruct((N_pad, 1), jnp.float32),
        grid=(N_pad // tile_n,),
        in_specs=[
            pl.BlockSpec((tile_n, C), lambda i: (i, 0)),
            pl.BlockSpec((tile_n, C), lambda i: (i, 0)),
            pl.BlockSpec((tile_n, 1), lambda i: (i, 0)),
        ],
        out_specs=pl.BlockSpec((tile_n, 1), lambda i: (i, 0)),
        compiler_params=pltpu.CompilerParams(dimension_semantics=("parallel",)),
    )(x, onehot, w)

    return jnp.sum(wnll) / jnp.sum(w)


# ---------------------------------------------------------------------------
# Hungarian matcher (host assignment) + SetCriterion forward
# ---------------------------------------------------------------------------
def _linear_sum_assignment_small(cost):
    # TODO(synk): scipy.optimize.linear_sum_assignment has no Pallas equivalent;
    # brute-force Hungarian assignment on host (demo sizes are tiny).
    nq, k = cost.shape
    best_perm, best_cost = None, np.inf
    for perm in itertools.permutations(range(nq), k):
        c = cost[list(perm), list(range(k))].sum()
        if c < best_cost:
            best_cost, best_perm = c, perm
    rows = np.array(best_perm, dtype=np.int64)
    cols = np.arange(k, dtype=np.int64)
    order = np.argsort(rows)
    return rows[order], cols[order]


def hungarian_matcher(outputs, targets):
    tgt_ids = jnp.concatenate([t["labels"] for t in targets])
    tgt_boxes = jnp.concatenate([t["boxes"] for t in targets])
    C = compute_cost_matrix(outputs["pred_logits"], outputs["pred_boxes"],
                            tgt_ids, tgt_boxes)
    C_np = np.asarray(jax.block_until_ready(C))
    sizes = [int(t["boxes"].shape[0]) for t in targets]
    indices, start = [], 0
    for i, s in enumerate(sizes):
        indices.append(_linear_sum_assignment_small(C_np[i, :, start:start + s]))
        start += s
    return indices


def _box_cxcywh_to_xyxy(b):
    cx, cy, w, h = b[..., 0], b[..., 1], b[..., 2], b[..., 3]
    return jnp.stack([cx - 0.5 * w, cy - 0.5 * h, cx + 0.5 * w, cy + 0.5 * h], axis=-1)


def _generalized_box_iou_diag(b1, b2):
    area1 = (b1[:, 2] - b1[:, 0]) * (b1[:, 3] - b1[:, 1])
    area2 = (b2[:, 2] - b2[:, 0]) * (b2[:, 3] - b2[:, 1])
    lt = jnp.maximum(b1[:, :2], b2[:, :2]); rb = jnp.minimum(b1[:, 2:], b2[:, 2:])
    wh = jnp.clip(rb - lt, 0.0); inter = wh[:, 0] * wh[:, 1]
    union = area1 + area2 - inter
    iou = inter / union
    elt = jnp.minimum(b1[:, :2], b2[:, :2]); erb = jnp.maximum(b1[:, 2:], b2[:, 2:])
    ewh = jnp.clip(erb - elt, 0.0); enc = ewh[:, 0] * ewh[:, 1]
    return iou - (enc - union) / enc


def _reference_weighted_ce(logits, target_classes, class_weight):
    logp = jax.nn.log_softmax(logits.astype(jnp.float32), axis=-1)
    nll = -jnp.take_along_axis(logp, target_classes[:, None], axis=-1)[:, 0]
    w = class_weight[target_classes]
    return jnp.sum(w * nll) / jnp.sum(w)


def set_criterion_forward(outputs, targets, num_classes, eos_coef=EOS_COEF,
                          use_pallas_ce=True):
    indices = hungarian_matcher(outputs, targets)
    num_boxes = float(sum(int(t["labels"].shape[0]) for t in targets))

    pred_logits = outputs["pred_logits"]
    pred_boxes = outputs["pred_boxes"]
    bs, nq, C = pred_logits.shape

    # ---- loss_ce: weighted cross entropy over all queries ----
    target_classes = np.full((bs, nq), num_classes, dtype=np.int32)
    for b, (src, tgt_j) in enumerate(indices):
        labels = np.asarray(targets[b]["labels"])
        target_classes[b, np.asarray(src)] = labels[np.asarray(tgt_j)]
    empty_weight = np.ones((C,), np.float32)
    empty_weight[-1] = eos_coef
    tc = jnp.asarray(target_classes.reshape(-1), dtype=jnp.int32)
    ew = jnp.asarray(empty_weight)
    flat_logits = pred_logits.reshape(bs * nq, C)
    if use_pallas_ce:
        loss_ce = weighted_cross_entropy(flat_logits, tc, ew)
    else:
        loss_ce = _reference_weighted_ce(flat_logits, tc, ew)

    # ---- loss_bbox / loss_giou on matched pairs ----
    # TODO(synk): matched-pair gather is data-dependent and tiny (num_boxes rows);
    # kept in plain JAX rather than a Pallas kernel.
    src_rows = np.concatenate(
        [b * nq + np.asarray(src, dtype=np.int32) for b, (src, _) in enumerate(indices)])
    src_boxes = pred_boxes.reshape(bs * nq, 4)[jnp.asarray(src_rows, dtype=jnp.int32)]
    matched_tgt = jnp.concatenate(
        [jnp.asarray(np.asarray(t["boxes"])[np.asarray(j)])
         for t, (_, j) in zip(targets, indices)], axis=0)

    loss_bbox = jnp.sum(jnp.abs(src_boxes - matched_tgt)) / num_boxes
    giou = _generalized_box_iou_diag(_box_cxcywh_to_xyxy(src_boxes),
                                     _box_cxcywh_to_xyxy(matched_tgt))
    loss_giou = jnp.sum(1.0 - giou) / num_boxes
    return {"loss_ce": loss_ce, "loss_bbox": loss_bbox, "loss_giou": loss_giou}


# ---------------------------------------------------------------------------
# Pure-JAX reference for the cost matrix (correctness check)
# ---------------------------------------------------------------------------
def _reference_cost(pred_logits, pred_boxes, tgt_ids, tgt_boxes):
    bs, nq, nc = pred_logits.shape
    prob = jax.nn.softmax(pred_logits.reshape(-1, nc), axis=-1)
    out_bbox = pred_boxes.reshape(-1, 4)
    cost_class = -prob[:, tgt_ids]
    cost_bbox = jnp.sum(jnp.abs(out_bbox[:, None, :] - tgt_boxes[None, :, :]), axis=-1)

    b1, b2 = _box_cxcywh_to_xyxy(out_bbox), _box_cxcywh_to_xyxy(tgt_boxes)
    area1 = (b1[:, 2] - b1[:, 0]) * (b1[:, 3] - b1[:, 1])
    area2 = (b2[:, 2] - b2[:, 0]) * (b2[:, 3] - b2[:, 1])
    lt = jnp.maximum(b1[:, None, :2], b2[None, :, :2])
    rb = jnp.minimum(b1[:, None, 2:], b2[None, :, 2:])
    wh = jnp.clip(rb - lt, 0.0)
    inter = wh[..., 0] * wh[..., 1]
    union = area1[:, None] + area2[None, :] - inter
    iou = inter / union
    elt = jnp.minimum(b1[:, None, :2], b2[None, :, :2])
    erb = jnp.maximum(b1[:, None, 2:], b2[None, :, 2:])
    ewh = jnp.clip(erb - elt, 0.0)
    enc = ewh[..., 0] * ewh[..., 1]
    giou = iou - (enc - union) / enc
    C = COST_BBOX * cost_bbox + COST_CLASS * cost_class + COST_GIOU * (-giou)
    return C.reshape(bs, nq, -1)


if __name__ == "__main__":
    key = jax.random.PRNGKey(0)
    bs, nq = 2, 8
    num_classes = 7                 # logits have num_classes + 1 channels
    C = num_classes + 1
    n_tgt_per_img = 3

    k1, k2, k3, k4 = jax.random.split(key, 4)
    pred_logits = jax.random.normal(k1, (bs, nq, C), dtype=jnp.float32)
    pc = jax.random.uniform(k2, (bs, nq, 2), minval=0.3, maxval=0.7)
    pwh = jax.random.uniform(jax.random.fold_in(k2, 1), (bs, nq, 2),
                             minval=0.1, maxval=0.3)
    pred_boxes = jnp.concatenate([pc, pwh], axis=-1).astype(jnp.float32)

    targets = []
    for b in range(bs):
        kk1, kk2 = jax.random.split(jax.random.fold_in(k3, b))
        labels = jax.random.randint(kk1, (n_tgt_per_img,), 0, num_classes)
        tc_ = jax.random.uniform(kk2, (n_tgt_per_img, 2), minval=0.3, maxval=0.7)
        twh = jax.random.uniform(jax.random.fold_in(k4, b), (n_tgt_per_img, 2),
                                 minval=0.1, maxval=0.3)
        targets.append({"labels": labels,
                        "boxes": jnp.concatenate([tc_, twh], -1).astype(jnp.float32)})

    outputs = {"pred_logits": pred_logits, "pred_boxes": pred_boxes}

    # ---- correctness: Pallas cost matrix vs pure-JAX reference ----
    tgt_ids = jnp.concatenate([t["labels"] for t in targets])
    tgt_boxes = jnp.concatenate([t["boxes"] for t in targets])
    C_kernel = np.asarray(jax.block_until_ready(
        compute_cost_matrix(pred_logits, pred_boxes, tgt_ids, tgt_boxes)))
    C_ref = np.asarray(_reference_cost(pred_logits, pred_boxes, tgt_ids, tgt_boxes))
    np.testing.assert_allclose(C_kernel, C_ref, rtol=1e-3, atol=1e-3)

    # ---- full SetCriterion forward (Pallas CE) vs pure-JAX CE reference ----
    losses = set_criterion_forward(outputs, targets, num_classes)
    losses = {k: float(jax.block_until_ready(v)) for k, v in losses.items()}
    losses_ref = set_criterion_forward(outputs, targets, num_classes,
                                       use_pallas_ce=False)
    losses_ref = {k: float(jax.block_until_ready(v)) for k, v in losses_ref.items()}
    for k in ("loss_ce", "loss_bbox", "loss_giou"):
        np.testing.assert_allclose(losses[k], losses_ref[k], rtol=1e-3, atol=1e-3)

    print("KERNEL_OK")
</pallas_src>

<mosaic_0001>
module attributes {stable_mosaic.version = 11 : i64} {
  func.func @_cost_kernel(%arg0: i32, %arg1: memref<16x8xf32, #tpu.memory_space<vmem>>, %arg2: memref<16x4xf32, #tpu.memory_space<vmem>>, %arg3: memref<8x128xf32, #tpu.memory_space<vmem>>, %arg4: memref<4x128xf32, #tpu.memory_space<vmem>>, %arg5: memref<16x128xf32, #tpu.memory_space<vmem>>) attributes {dimension_semantics = [#tpu.dimension_semantics<parallel>], iteration_bounds = array<i64: 1>, scalar_prefetch = 0 : i64, scratch_operands = 0 : i64, tpu.core_type = #tpu.core_type<tc>, window_params = [{transform_indices = @transform_0, window_bounds = array<i64: 16, 8>}, {transform_indices = @transform_1, window_bounds = array<i64: 16, 4>}, {pipeline_mode = #tpu.pipeline_mode<synchronous>, transform_indices = @transform_2, window_bounds = array<i64: 8, 128>}, {pipeline_mode = #tpu.pipeline_mode<synchronous>, transform_indices = @transform_3, window_bounds = array<i64: 4, 128>}, {transform_indices = @transform_4, window_bounds = array<i64: 16, 128>}]} {
    %c0 = arith.constant 0 : index
    %c0_0 = arith.constant 0 : index
    %0 = vector.load %arg1[%c0, %c0_0] : memref<16x8xf32, #tpu.memory_space<vmem>>, vector<16x8xf32>
    %cst = arith.constant dense<0xFF800000> : vector<16xf32>
    %1 = vector.multi_reduction <maximumf>, %0, %cst [1] : vector<16x8xf32> to vector<16xf32>
    %2 = vector.shape_cast %1 : vector<16xf32> to vector<16x1xf32>
    %3 = vector.broadcast %2 : vector<16x1xf32> to vector<16x8xf32>
    %4 = arith.subf %0, %3 : vector<16x8xf32>
    %5 = math.exp %4 : vector<16x8xf32>
    %cst_1 = arith.constant dense<0.000000e+00> : vector<16xf32>
    %6 = vector.multi_reduction <add>, %5, %cst_1 [1] : vector<16x8xf32> to vector<16xf32>
    %7 = vector.shape_cast %6 : vector<16xf32> to vector<16x1xf32>
    %8 = tpu.reciprocal %7 : vector<16x1xf32> -> vector<16x1xf32>
    %9 = vector.broadcast %8 : vector<16x1xf32> to vector<16x8xf32>
    %10 = arith.mulf %5, %9 : vector<16x8xf32>
    %c0_2 = arith.constant 0 : index
    %c0_3 = arith.constant 0 : index
    %11 = vector.load %arg3[%c0_2, %c0_3] : memref<8x128xf32, #tpu.memory_space<vmem>>, vector<8x128xf32>
    %cst_4 = arith.constant dense<0.000000e+00> : vector<16x128xf32>
    %12 = tpu.matmul %10, %11, %cst_4 {dimension_numbers = #tpu.dot_dimension_numbers<[1], [0], [0], [1], [0, 0, 1, 1], [], []>} : vector<16x8xf32>, vector<8x128xf32>, vector<16x128xf32> -> vector<16x128xf32>
    %cst_5 = arith.constant -1.000000e+00 : f32
    %13 = vector.broadcast %cst_5 : f32 to vector<16x128xf32>
    %14 = arith.mulf %13, %12 : vector<16x128xf32>
    %c0_6 = arith.constant 0 : index
    %c0_7 = arith.constant 0 : index
    %15 = vector.load %arg2[%c0_6, %c0_7] : memref<16x4xf32, #tpu.memory_space<vmem>>, vector<16x4xf32>
    %c0_8 = arith.constant 0 : index
    %c0_9 = arith.constant 0 : index
    %16 = vector.load %arg4[%c0_8, %c0_9] : memref<4x128xf32, #tpu.memory_space<vmem>>, vector<4x128xf32>
    %17 = vector.extract_strided_slice %15 {offsets = [0, 0], sizes = [16, 1], strides = [1, 1]} : vector<16x4xf32> to vector<16x1xf32>
    %18 = vector.extract_strided_slice %15 {offsets = [0, 1], sizes = [16, 1], strides = [1, 1]} : vector<16x4xf32> to vector<16x1xf32>
    %19 = vector.extract_strided_slice %15 {offsets = [0, 2], sizes = [16, 1], strides = [1, 1]} : vector<16x4xf32> to vector<16x1xf32>
    %20 = vector.extract_strided_slice %15 {offsets = [0, 3], sizes = [16, 1], strides = [1, 1]} : vector<16x4xf32> to vector<16x1xf32>
    %21 = vector.extract_strided_slice %16 {offsets = [0, 0], sizes = [1, 128], strides = [1, 1]} : vector<4x128xf32> to vector<1x128xf32>
    %22 = vector.extract_strided_slice %16 {offsets = [1, 0], sizes = [1, 128], strides = [1, 1]} : vector<4x128xf32> to vector<1x128xf32>
    %23 = vector.extract_strided_slice %16 {offsets = [2, 0], sizes = [1, 128], strides = [1, 1]} : vector<4x128xf32> to vector<1x128xf32>
    %24 = vector.extract_strided_slice %16 {offsets = [3, 0], sizes = [1, 128], strides = [1, 1]} : vector<4x128xf32> to vector<1x128xf32>
    %25 = vector.broadcast %17 : vector<16x1xf32> to vector<16x128xf32>
    %26 = vector.broadcast %21 : vector<1x128xf32> to vector<16x128xf32>
    %27 = arith.subf %25, %26 : vector<16x128xf32>
    %28 = math.absf %27 : vector<16x128xf32>
    %cst_10 = arith.constant 5.000000e+00 : f32
    %29 = vector.broadcast %cst_10 : f32 to vector<16x128xf32>
    %30 = arith.mulf %29, %28 : vector<16x128xf32>
    %31 = arith.addf %14, %30 : vector<16x128xf32>
    %32 = vector.broadcast %18 : vector<16x1xf32> to vector<16x128xf32>
    %33 = vector.broadcast %22 : vector<1x128xf32> to vector<16x128xf32>
    %34 = arith.subf %32, %33 : vector<16x128xf32>
    %35 = math.absf %34 : vector<16x128xf32>
    %cst_11 = arith.constant 5.000000e+00 : f32
    %36 = vector.broadcast %cst_11 : f32 to vector<16x128xf32>
    %37 = arith.mulf %36, %35 : vector<16x128xf32>
    %38 = arith.addf %31, %37 : vector<16x128xf32>
    %39 = vector.broadcast %19 : vector<16x1xf32> to vector<16x128xf32>
    %40 = vector.broadcast %23 : vector<1x128xf32> to vector<16x128xf32>
    %41 = arith.subf %39, %40 : vector<16x128xf32>
    %42 = math.absf %41 : vector<16x128xf32>
    %cst_12 = arith.constant 5.000000e+00 : f32
    %43 = vector.broadcast %cst_12 : f32 to vector<16x128xf32>
    %44 = arith.mulf %43, %42 : vector<16x128xf32>
    %45 = arith.addf %38, %44 : vector<16x128xf32>
    %46 = vector.broadcast %20 : vector<16x1xf32> to vector<16x128xf32>
    %47 = vector.broadcast %24 : vector<1x128xf32> to vector<16x128xf32>
    %48 = arith.subf %46, %47 : vector<16x128xf32>
    %49 = math.absf %48 : vector<16x128xf32>
    %cst_13 = arith.constant 5.000000e+00 : f32
    %50 = vector.broadcast %cst_13 : f32 to vector<16x128xf32>
    %51 = arith.mulf %50, %49 : vector<16x128xf32>
    %52 = arith.addf %45, %51 : vector<16x128xf32>
    %cst_14 = arith.constant 5.000000e-01 : f32
    %53 = vector.broadcast %cst_14 : f32 to vector<16x1xf32>
    %54 = arith.mulf %53, %19 : vector<16x1xf32>
    %55 = arith.subf %17, %54 : vector<16x1xf32>
    %cst_15 = arith.constant 5.000000e-01 : f32
    %56 = vector.broadcast %cst_15 : f32 to vector<16x1xf32>
    %57 = arith.mulf %56, %20 : vector<16x1xf32>
    %58 = arith.subf %18, %57 : vector<16x1xf32>
    %cst_16 = arith.constant 5.000000e-01 : f32
    %59 = vector.broadcast %cst_16 : f32 to vector<16x1xf32>
    %60 = arith.mulf %59, %19 : vector<16x1xf32>
    %61 = arith.addf %17, %60 : vector<16x1xf32>
    %cst_17 = arith.constant 5.000000e-01 : f32
    %62 = vector.broadcast %cst_17 : f32 to vector<16x1xf32>
    %63 = arith.mulf %62, %20 : vector<16x1xf32>
    %64 = arith.addf %18, %63 : vector<16x1xf32>
    %cst_18 = arith.constant 5.000000e-01 : f32
    %65 = vector.broadcast %cst_18 : f32 to vector<1x128xf32>
    %66 = arith.mulf %65, %23 : vector<1x128xf32>
    %67 = arith.subf %21, %66 : vector<1x128xf32>
    %cst_19 = arith.constant 5.000000e-01 : f32
    %68 = vector.broadcast %cst_19 : f32 to vector<1x128xf32>
    %69 = arith.mulf %68, %24 : vector<1x128xf32>
    %70 = arith.subf %22, %69 : vector<1x128xf32>
    %cst_20 = arith.constant 5.000000e-01 : f32
    %71 = vector.broadcast %cst_20 : f32 to vector<1x128xf32>
    %72 = arith.mulf %71, %23 : vector<1x128xf32>
    %73 = arith.addf %21, %72 : vector<1x128xf32>
    %cst_21 = arith.constant 5.000000e-01 : f32
    %74 = vector.broadcast %cst_21 : f32 to vector<1x128xf32>
    %75 = arith.mulf %74, %24 : vector<1x128xf32>
    %76 = arith.addf %22, %75 : vector<1x128xf32>
    %77 = arith.mulf %19, %20 : vector<16x1xf32>
    %78 = arith.mulf %23, %24 : vector<1x128xf32>
    %79 = vector.broadcast %61 : vector<16x1xf32> to vector<16x128xf32>
    %80 = vector.broadcast %73 : vector<1x128xf32> to vector<16x128xf32>
    %81 = arith.minimumf %79, %80 : vector<16x128xf32>
    %82 = vector.broadcast %55 : vector<16x1xf32> to vector<16x128xf32>
    %83 = vector.broadcast %67 : vector<1x128xf32> to vector<16x128xf32>
    %84 = arith.maximumf %82, %83 : vector<16x128xf32>
    %85 = arith.subf %81, %84 : vector<16x128xf32>
    %cst_22 = arith.constant 0.000000e+00 : f32
    %86 = vector.broadcast %cst_22 : f32 to vector<16x128xf32>
    %87 = arith.maximumf %85, %86 : vector<16x128xf32>
    %88 = vector.broadcast %64 : vector<16x1xf32> to vector<16x128xf32>
    %89 = vector.broadcast %76 : vector<1x128xf32> to vector<16x128xf32>
    %90 = arith.minimumf %88, %89 : vector<16x128xf32>
    %91 = vector.broadcast %58 : vector<16x1xf32> to vector<16x128xf32>
    %92 = vector.broadcast %70 : vector<1x128xf32> to vector<16x128xf32>
    %93 = arith.maximumf %91, %92 : vector<16x128xf32>
    %94 = arith.subf %90, %93 : vector<16x128xf32>
    %cst_23 = arith.constant 0.000000e+00 : f32
    %95 = vector.broadcast %cst_23 : f32 to vector<16x128xf32>
    %96 = arith.maximumf %94, %95 : vector<16x128xf32>
    %97 = arith.mulf %87, %96 : vector<16x128xf32>
    %98 = vector.broadcast %77 : vector<16x1xf32> to vector<16x128xf32>
    %99 = vector.broadcast %78 : vector<1x128xf32> to vector<16x128xf32>
    %100 = arith.addf %98, %99 : vector<16x128xf32>
    %101 = arith.subf %100, %97 : vector<16x128xf32>
    %102 = vector.broadcast %61 : vector<16x1xf32> to vector<16x128xf32>
    %103 = vector.broadcast %73 : vector<1x128xf32> to vector<16x128xf32>
    %104 = arith.maximumf %102, %103 : vector<16x128xf32>
    %105 = vector.broadcast %55 : vector<16x1xf32> to vector<16x128xf32>
    %106 = vector.broadcast %67 : vector<1x128xf32> to vector<16x128xf32>
    %107 = arith.minimumf %105, %106 : vector<16x128xf32>
    %108 = arith.subf %104, %107 : vector<16x128xf32>
    %cst_24 = arith.constant 0.000000e+00 : f32
    %109 = vector.broadcast %cst_24 : f32 to vector<16x128xf32>
    %110 = arith.maximumf %108, %109 : vector<16x128xf32>
    %111 = vector.broadcast %64 : vector<16x1xf32> to vector<16x128xf32>
    %112 = vector.broadcast %76 : vector<1x128xf32> to vector<16x128xf32>
    %113 = arith.maximumf %111, %112 : vector<16x128xf32>
    %114 = vector.broadcast %58 : vector<16x1xf32> to vector<16x128xf32>
    %115 = vector.broadcast %70 : vector<1x128xf32> to vector<16x128xf32>
    %116 = arith.minimumf %114, %115 : vector<16x128xf32>
    %117 = arith.subf %113, %116 : vector<16x128xf32>
    %cst_25 = arith.constant 0.000000e+00 : f32
    %118 = vector.broadcast %cst_25 : f32 to vector<16x128xf32>
    %119 = arith.maximumf %117, %118 : vector<16x128xf32>
    %120 = arith.mulf %110, %119 : vector<16x128xf32>
    %121 = tpu.reciprocal %101 : vector<16x128xf32> -> vector<16x128xf32>
    %122 = tpu.reciprocal %120 : vector<16x128xf32> -> vector<16x128xf32>
    %123 = arith.mulf %97, %121 : vector<16x128xf32>
    %cst_26 = arith.constant 1.000000e+00 : f32
    %124 = vector.broadcast %cst_26 : f32 to vector<16x128xf32>
    %125 = arith.subf %123, %124 : vector<16x128xf32>
    %126 = arith.mulf %101, %122 : vector<16x128xf32>
    %127 = arith.addf %125, %126 : vector<16x128xf32>
    %cst_27 = arith.constant 0.000000e+00 : f32
    %128 = vector.broadcast %cst_27 : f32 to vector<16x128xf32>
    %129 = arith.subf %128, %127 : vector<16x128xf32>
    %cst_28 = arith.constant 2.000000e+00 : f32
    %130 = vector.broadcast %cst_28 : f32 to vector<16x128xf32>
    %131 = arith.mulf %130, %129 : vector<16x128xf32>
    %132 = arith.addf %52, %131 : vector<16x128xf32>
    %c0_29 = arith.constant 0 : index
    %c0_30 = arith.constant 0 : index
    %133 = vector.load %arg5[%c0_29, %c0_30] : memref<16x128xf32, #tpu.memory_space<vmem>>, vector<16x128xf32>
    tpu.vector_store %arg5[%c0_29, %c0_30], %132 {strides = array<i32>} : memref<16x128xf32, #tpu.memory_space<vmem>>, vector<16x128xf32>,
    return
  }
  func.func @transform_0(%arg0: i32) -> (i32, i32) {
    %c0_i32 = arith.constant 0 : i32
    %c0_i32_0 = arith.constant 0 : i32
    return %arg0, %c0_i32 : i32, i32
  }
  func.func @transform_1(%arg0: i32) -> (i32, i32) {
    %c0_i32 = arith.constant 0 : i32
    %c0_i32_0 = arith.constant 0 : i32
    return %arg0, %c0_i32 : i32, i32
  }
  func.func @transform_2(%arg0: i32) -> (i32, i32) {
    %c0_i32 = arith.constant 0 : i32
    %c0_i32_0 = arith.constant 0 : i32
    %c0_i32_1 = arith.constant 0 : i32
    return %c0_i32, %c0_i32_0 : i32, i32
  }
  func.func @transform_3(%arg0: i32) -> (i32, i32) {
    %c0_i32 = arith.constant 0 : i32
    %c0_i32_0 = arith.constant 0 : i32
    %c0_i32_1 = arith.constant 0 : i32
    return %c0_i32, %c0_i32_0 : i32, i32
  }
  func.func @transform_4(%arg0: i32) -> (i32, i32) {
    %c0_i32 = arith.constant 0 : i32
    %c0_i32_0 = arith.constant 0 : i32
    return %arg0, %c0_i32 : i32, i32
  }
}

</mosaic_0001>

<llo_original>
// kernel: tpu_custom_call.1
$region0: #{tpu_custom_call.1}
  #allocation0 [shape = 'u32[]', space=smem, size = 0x4, offset = 0x4, fixed_abs, tag = 'smem constant byte address 0x4 - core index']
  #allocation1 [shape = 'u32[72,128]{1,0:T(1,128)}', space=vmem, size = 0x9000, scoped, tag = 'internal scratch']
  %s0 = inlined_call_operand.vmem [shape: f32[16,8], index: 0, kind: input, shape index: {}]
  %s1 = inlined_call_operand.vmem [shape: f32[16,4], index: 1, kind: input, shape index: {}]
  %s2 = inlined_call_operand.vmem [shape: f32[8,128], index: 2, kind: input, shape index: {}]
  %s3 = inlined_call_operand.vmem [shape: f32[4,128], index: 3, kind: input, shape index: {}]
  %s4 = inlined_call_operand.hbm [shape: f32[16,128], index: 4, kind: output, shape index: {}]
  %s5 = sld [smem:[#allocation0]]
  $region26: #{tpu_custom_call.1} parent=0
    _
  %s7 = ssub.s32 1, %s5
  %s8 = scalar_select 0, %s7, %s5
  $region1: #{tpu_custom_call.1} parent=0
    #allocation2 [shape = 'u8[8192]{0}', space=vmem, size = 0x2000, scoped, tag = 'output window, operand 0, single buffered']
    #allocation3 [shape = 's32[1]{0}', space=sflag, size = 0x4, scoped, tag = 'scoped memory for tpu_custom_call.1']
    %9 = vsyncpa [#allocation3], 0
    // Predicated region
    $region2: #{tpu_custom_call.1} parent=1 // pred_check
      _
    $region3: #{tpu_custom_call.1} parent=1 // pred_check_branch
      %11 = sbr.rel (0) target = $region5
    $region4: #{tpu_custom_call.1} parent=1 // pred_region
      _
    $region5: #{tpu_custom_call.1} parent=1 // pred_fallthru
      _
    // Predicated region
    $region6: #{tpu_custom_call.1} parent=1 // pred_check
      _
    $region7: #{tpu_custom_call.1} parent=1 // pred_check_branch
      %13 = sbr.rel (0) target = $region9
    $region8: #{tpu_custom_call.1} parent=1 // pred_region
      _
    $region9: #{tpu_custom_call.1} parent=1 // pred_fallthru
      _
    // Predicated region
    $region10: #{tpu_custom_call.1} parent=1 // pred_check
      _
    $region11: #{tpu_custom_call.1} parent=1 // pred_check_branch
      %15 = sbr.rel (0) target = $region13
    $region12: #{tpu_custom_call.1} parent=1 // pred_region
      _
    $region13: #{tpu_custom_call.1} parent=1 // pred_fallthru
      _
    // Predicated region
    $region14: #{tpu_custom_call.1} parent=1 // pred_check
      _
    $region15: #{tpu_custom_call.1} parent=1 // pred_check_branch
      %17 = sbr.rel (0) target = $region17
    $region16: #{tpu_custom_call.1} parent=1 // pred_region
      _
    $region17: #{tpu_custom_call.1} parent=1 // pred_fallthru
      _
    %v18 = vld [vmem:[%s0] sm:$0xff]
    %v19 = vld [vmem:[%s0 + $0x8] sm:$0xff]
    %vm20 = vcmask 64512
    %v21 = vsel %vm20, %v18, -inf
    %22 = vmax.xlane.f32.xlu0 %v21
    %v23 = vpop.xlane.xlu0 %22
    %v24 = vsel %vm20, %v19, -inf
    %25 = vmax.xlane.f32.xlu0 %v24
    %v26 = vpop.xlane.xlu0 %25
    %v27 = vsub.f32 %v18, %v23
    %v28 = vsub.f32 %v19, %v26
    %v29 = vmul.f32 %v27, 1.442695
    %v30 = vpow.pop %v29
    %v31 = vmul.f32 %v28, 1.442695
    %v32 = vpow.pop %v31
    %v33 = vsel %vm20, %v30, 0.0
    %34 = vadd.xlane.f32.xlu0 %v33
    %v35 = vpop.xlane.xlu0 %34
    %v36 = vsel %vm20, %v32, 0.0
    %37 = vadd.xlane.f32.xlu0 %v36
    %v38 = vpop.xlane.xlu0 %37
    %v39 = vrcp.pop %v35
    %v40 = vmul.f32 %v35, %v39
    %v41 = vsub.f32 1.0, %v40
    %v42 = vmul.f32 %v39, %v41
    %v43 = vadd.f32 %v39, %v42
    %vm44 = vweird.f32 %v35
    %vm45 = vweird.f32 %v39
    %vm46 = vmor %vm44, %vm45
    %v47 = vsel %vm46, %v39, %v43
    %v48 = vand.u32 2147483647, %v35
    %vm49 = vcmp.eq.f32.partialorder %v48, 8.507059e+37
    %v50 = vand.u32 %v35, 2147483648
    %v51 = vor.u32 1.1754944e-38, %v50
    %v52 = vsel %vm49, %v51, %v47
    %v53 = vrcp.pop %v38
    %v54 = vmul.f32 %v38, %v53
    %v55 = vsub.f32 1.0, %v54
    %v56 = vmul.f32 %v53, %v55
    %v57 = vadd.f32 %v53, %v56
    %vm58 = vweird.f32 %v38
    %vm59 = vweird.f32 %v53
    %vm60 = vmor %vm58, %vm59
    %v61 = vsel %vm60, %v53, %v57
    %v62 = vand.u32 2147483647, %v38
    %vm63 = vcmp.eq.f32.partialorder %v62, 8.507059e+37
    %v64 = vand.u32 %v38, 2147483648
    %v65 = vor.u32 1.1754944e-38, %v64
    %v66 = vsel %vm63, %v65, %v61
    %v67 = vmul.f32 %v30, %v52
    %v68 = vmul.f32 %v32, %v66
    %v69 = vld [vmem:[%s2] sm:$0xff]
    %v71 = vsel %vm20, %v67, 0
    %v74 = vsel %vm20, %v68, 0
    %76 = vmatpush.msra.mxu0 0.0
    %77 = vmatpush.msra.mxu0 0.0
    %78 = vmatpush.msra.mxu0 0.0
    %79 = vmatpush.msra.mxu0 0.0
    %80 = vmatpush.msra.mxu0 0.0
    %81 = vmatpush.msra.mxu0 0.0
    %82 = vmatpush.msra.mxu0 0.0
    %83 = vmatpush.msra.mxu0 0.0
    %84 = vmatpush.msra.mxu0 0.0
    %85 = vmatpush.msra.mxu0 0.0
    %86 = vmatpush.msra.mxu0 0.0
    %87 = vmatpush.msra.mxu0 0.0
    %88 = vmatpush.msra.mxu0 0.0
    %89 = vmatpush.msra.mxu0 0.0
    %90 = vmatpush.msra.mxu0 0.0
    %91 = vmatpush.msra.mxu0 %v69
    %92 = vmatmul.f32.gmra.mxu0 %v71
    %v93 = vpop.f32.mrf.mxu0
    %v94 = vadd.f32 0.0, %v93
    %95 = vmatmul.f32.gmra.mxu0 %v74
    %v96 = vpop.f32.mrf.mxu0
    %v97 = vadd.f32 0.0, %v96
    %98 = vdwg.mxu0
    %v99 = vmul.f32 %v94, -1.0
    %v100 = vmul.f32 %v97, -1.0
    %v101 = vld [vmem:[%s1] sm:$0xff]
    %v102 = vld [vmem:[%s1 + $0x8] sm:$0xff]
    %v103 = vld [vmem:[%s3] sm:$0xf]
    %105 = vset.pattern.permute.xlu0 0
    %106 = vperm.xlu0 %105, %v101
    %v107 = vpop.permute.xlu0 %106
    %110 = vset.pattern.permute.xlu0 0
    %111 = vperm.xlu0 %110, %v102
    %v112 = vpop.permute.xlu0 %111
    %v114 = vperm.slane %v103, 0
    %v115 = vsub.f32 %v107, %v114
    %v116 = vsub.f32 %v112, %v114
    %v117 = vand.u32 2147483647, %v115
    %v118 = vand.u32 2147483647, %v116
    %v119 = vmul.f32 %v117, 5.0
    %v120 = vmul.f32 %v118, 5.0
    %v121 = vadd.f32 %v99, %v119
    %v122 = vadd.f32 %v100, %v120
    %123 = vset.pattern.permute.xlu0 1
    %124 = vperm.xlu0 %123, %v101
    %v125 = vpop.permute.xlu0 %124
    %127 = vset.pattern.permute.xlu0 1
    %128 = vperm.xlu0 %127, %v102
    %v129 = vpop.permute.xlu0 %128
    %v131 = vperm.slane %v103, 1
    %v132 = vsub.f32 %v125, %v131
    %v133 = vsub.f32 %v129, %v131
    %v134 = vand.u32 2147483647, %v132
    %v135 = vand.u32 2147483647, %v133
    %v136 = vmul.f32 %v134, 5.0
    %v137 = vmul.f32 %v135, 5.0
    %v138 = vadd.f32 %v121, %v136
    %v139 = vadd.f32 %v122, %v137
    %140 = vset.pattern.permute.xlu0 2
    %141 = vperm.xlu0 %140, %v101
    %v142 = vpop.permute.xlu0 %141
    %144 = vset.pattern.permute.xlu0 2
    %145 = vperm.xlu0 %144, %v102
    %v146 = vpop.permute.xlu0 %145
    %v148 = vperm.slane %v103, 2
    %v149 = vsub.f32 %v142, %v148
    %v150 = vsub.f32 %v146, %v148
    %v151 = vand.u32 2147483647, %v149
    %v152 = vand.u32 2147483647, %v150
    %v153 = vmul.f32 %v151, 5.0
    %v154 = vmul.f32 %v152, 5.0
    %v155 = vadd.f32 %v138, %v153
    %v156 = vadd.f32 %v139, %v154
    %157 = vset.pattern.permute.xlu0 3
    %158 = vperm.xlu0 %157, %v101
    %v159 = vpop.permute.xlu0 %158
    %161 = vset.pattern.permute.xlu0 3
    %162 = vperm.xlu0 %161, %v102
    %v163 = vpop.permute.xlu0 %162
    %v165 = vperm.slane %v103, 3
    %v166 = vsub.f32 %v159, %v165
    %v167 = vsub.f32 %v163, %v165
    %v168 = vand.u32 2147483647, %v166
    %v169 = vand.u32 2147483647, %v167
    %v170 = vmul.f32 %v168, 5.0
    %v171 = vmul.f32 %v169, 5.0
    %v172 = vadd.f32 %v155, %v170
    %v173 = vadd.f32 %v156, %v171
    %v174 = vmul.f32 %v101, 0.5
    %v175 = vmul.f32 %v102, 0.5
    %178 = vrot.lane.b32.xlu0 %v174, 126
    %v179 = vpop.permute.xlu0 %178
    %180 = vrot.lane.b32.xlu0 %v175, 126
    %v181 = vpop.permute.xlu0 %180
    %v184 = vsub.f32 %v101, %v179
    %v185 = vsub.f32 %v102, %v181
    %v186 = vadd.f32 %v101, %v179
    %v187 = vadd.f32 %v102, %v181
    %v188 = vmul.f32 %v103, 0.5
    %v190 = vrot.slane %v188, 2
    %v192 = vsub.f32 %v103, %v190
    %v193 = vadd.f32 %v103, %v190
    %194 = vrot.lane.b32.xlu0 %v101, 127
    %v195 = vpop.permute.xlu0 %194
    %196 = vrot.lane.b32.xlu0 %v102, 127
    %v197 = vpop.permute.xlu0 %196
    %v200 = vmul.f32 %v101, %v195
    %v201 = vmul.f32 %v102, %v197
    %v203 = vrot.slane %v103, 1
    %v205 = vmul.f32 %v103, %v203
    %207 = vset.pattern.permute.xlu0 0
    %208 = vperm.xlu0 %207, %v186
    %v209 = vpop.permute.xlu0 %208
    %212 = vset.pattern.permute.xlu0 0
    %213 = vperm.xlu0 %212, %v187
    %v214 = vpop.permute.xlu0 %213
    %v216 = vperm.slane %v193, 0
    %v217 = vmin.f32 %v209, %v216
    %v218 = vmin.f32 %v214, %v216
    %220 = vset.pattern.permute.xlu0 0
    %221 = vperm.xlu0 %220, %v184
    %v222 = vpop.permute.xlu0 %221
    %225 = vset.pattern.permute.xlu0 0
    %226 = vperm.xlu0 %225, %v185
    %v227 = vpop.permute.xlu0 %226
    %v229 = vperm.slane %v192, 0
    %v230 = vmax.f32 %v222, %v229
    %v231 = vmax.f32 %v227, %v229
    %v232 = vsub.f32 %v217, %v230
    %v233 = vsub.f32 %v218, %v231
    %v234 = vmax.f32 %v232, 0.0
    %v235 = vmax.f32 %v233, 0.0
    %236 = vset.pattern.permute.xlu0 1
    %237 = vperm.xlu0 %236, %v186
    %v238 = vpop.permute.xlu0 %237
    %240 = vset.pattern.permute.xlu0 1
    %241 = vperm.xlu0 %240, %v187
    %v242 = vpop.permute.xlu0 %241
    %v244 = vperm.slane %v193, 1
    %v245 = vmin.f32 %v238, %v244
    %v246 = vmin.f32 %v242, %v244
    %247 = vset.pattern.permute.xlu0 1
    %248 = vperm.xlu0 %247, %v184
    %v249 = vpop.permute.xlu0 %248
    %251 = vset.pattern.permute.xlu0 1
    %252 = vperm.xlu0 %251, %v185
    %v253 = vpop.permute.xlu0 %252
    %v255 = vperm.slane %v192, 1
    %v256 = vmax.f32 %v249, %v255
    %v257 = vmax.f32 %v253, %v255
    %v258 = vsub.f32 %v245, %v256
    %v259 = vsub.f32 %v246, %v257
    %v260 = vmax.f32 %v258, 0.0
    %v261 = vmax.f32 %v259, 0.0
    %v262 = vmul.f32 %v234, %v260
    %v263 = vmul.f32 %v235, %v261
    %265 = vset.pattern.permute.xlu0 2
    %266 = vperm.xlu0 %265, %v200
    %v267 = vpop.permute.xlu0 %266
    %270 = vset.pattern.permute.xlu0 2
    %271 = vperm.xlu0 %270, %v201
    %v272 = vpop.permute.xlu0 %271
    %v274 = vperm.slane %v205, 2
    %v275 = vadd.f32 %v267, %v274
    %v276 = vadd.f32 %v272, %v274
    %v277 = vsub.f32 %v275, %v262
    %v278 = vsub.f32 %v276, %v263
    %v279 = vmax.f32 %v209, %v216
    %v280 = vmax.f32 %v214, %v216
    %v281 = vmin.f32 %v222, %v229
    %v282 = vmin.f32 %v227, %v229
    %v283 = vsub.f32 %v279, %v281
    %v284 = vsub.f32 %v280, %v282
    %v285 = vmax.f32 %v283, 0.0
    %v286 = vmax.f32 %v284, 0.0
    %v287 = vmax.f32 %v238, %v244
    %v288 = vmax.f32 %v242, %v244
    %v289 = vmin.f32 %v249, %v255
    %v290 = vmin.f32 %v253, %v255
    %v291 = vsub.f32 %v287, %v289
    %v292 = vsub.f32 %v288, %v290
    %v293 = vmax.f32 %v291, 0.0
    %v294 = vmax.f32 %v292, 0.0
    %v295 = vmul.f32 %v285, %v293
    %v296 = vmul.f32 %v286, %v294
    %v297 = vrcp.pop %v277
    %v298 = vmul.f32 %v277, %v297
    %v299 = vsub.f32 1.0, %v298
    %v300 = vmul.f32 %v297, %v299
    %v301 = vadd.f32 %v297, %v300
    %vm302 = vweird.f32 %v277
    %vm303 = vweird.f32 %v297
    %vm304 = vmor %vm302, %vm303
    %v305 = vsel %vm304, %v297, %v301
    %v306 = vand.u32 2147483647, %v277
    %vm307 = vcmp.eq.f32.partialorder %v306, 8.507059e+37
    %v308 = vand.u32 %v277, 2147483648
    %v309 = vor.u32 1.1754944e-38, %v308
    %v310 = vsel %vm307, %v309, %v305
    %v311 = vrcp.pop %v278
    %v312 = vmul.f32 %v278, %v311
    %v313 = vsub.f32 1.0, %v312
    %v314 = vmul.f32 %v311, %v313
    %v315 = vadd.f32 %v311, %v314
    %vm316 = vweird.f32 %v278
    %vm317 = vweird.f32 %v311
    %vm318 = vmor %vm316, %vm317
    %v319 = vsel %vm318, %v311, %v315
    %v320 = vand.u32 2147483647, %v278
    %vm321 = vcmp.eq.f32.partialorder %v320, 8.507059e+37
    %v322 = vand.u32 %v278, 2147483648
    %v323 = vor.u32 1.1754944e-38, %v322
    %v324 = vsel %vm321, %v323, %v319
    %v325 = vrcp.pop %v295
    %v326 = vmul.f32 %v295, %v325
    %v327 = vsub.f32 1.0, %v326
    %v328 = vmul.f32 %v325, %v327
    %v329 = vadd.f32 %v325, %v328
    %vm330 = vweird.f32 %v295
    %vm331 = vweird.f32 %v325
    %vm332 = vmor %vm330, %vm331
    %v333 = vsel %vm332, %v325, %v329
    %v334 = vand.u32 2147483647, %v295
    %vm335 = vcmp.eq.f32.partialorder %v334, 8.507059e+37
    %v336 = vand.u32 %v295, 2147483648
    %v337 = vor.u32 1.1754944e-38, %v336
    %v338 = vsel %vm335, %v337, %v333
    %v339 = vrcp.pop %v296
    %v340 = vmul.f32 %v296, %v339
    %v341 = vsub.f32 1.0, %v340
    %v342 = vmul.f32 %v339, %v341
    %v343 = vadd.f32 %v339, %v342
    %vm344 = vweird.f32 %v296
    %vm345 = vweird.f32 %v339
    %vm346 = vmor %vm344, %vm345
    %v347 = vsel %vm346, %v339, %v343
    %v348 = vand.u32 2147483647, %v296
    %vm349 = vcmp.eq.f32.partialorder %v348, 8.507059e+37
    %v350 = vand.u32 %v296, 2147483648
    %v351 = vor.u32 1.1754944e-38, %v350
    %v352 = vsel %vm349, %v351, %v347
    %v353 = vmul.f32 %v262, %v310
    %v354 = vmul.f32 %v263, %v324
    %v355 = vsub.f32 %v353, 1.0
    %v356 = vsub.f32 %v354, 1.0
    %v357 = vmul.f32 %v277, %v338
    %v358 = vmul.f32 %v278, %v352
    %v359 = vadd.f32 %v355, %v357
    %v360 = vadd.f32 %v356, %v358
    %v361 = vsub.f32 0.0, %v359
    %v362 = vsub.f32 0.0, %v360
    %v363 = vmul.f32 %v361, 2.0
    %v364 = vmul.f32 %v362, 2.0
    %v365 = vadd.f32 %v172, %v363
    %v366 = vadd.f32 %v173, %v364
    %367 = vst [vmem:[#allocation2] sm:$0xff] %v365
    %368 = vst [vmem:[#allocation2 + $0x8] sm:$0xff] %v366
    // Predicated region
    $region18: #{tpu_custom_call.1} parent=1 // pred_check
      _
    $region19: #{tpu_custom_call.1} parent=1 // pred_check_branch
      %370 = sbr.rel (0) target = $region21
    $region20: #{tpu_custom_call.1} parent=1 // pred_region
      %372 = vsyncadd [#allocation3], 0
      %s373 = sshll.u32 [#allocation2], 4
      %s374 = int_to_ptr.vmem [resolvable:$true] %s373
      %s375 = sshll.u32 %s4, 4
      %s376 = int_to_ptr.hbm [resolvable:$true] %s375
      %381 = dma.vmem_to_hbm [thread:$0]  %s374, 256, %s376, [#allocation3], 128, 128, 8
    $region21: #{tpu_custom_call.1} parent=1 // pred_fallthru
      _
    // Predicated region
    $region22: #{tpu_custom_call.1} parent=1 // pred_check
      _
    $region23: #{tpu_custom_call.1} parent=1 // pred_check_branch
      %383 = sbr.rel (0) target = $region25
    $region24: #{tpu_custom_call.1} parent=1 // pred_region
      %385 = dma.done [#allocation3], 256
    $region25: #{tpu_custom_call.1} parent=1 // pred_fallthru
      _
    %386 = vsyncpa [#allocation3], 1

</llo_original>
